<compile_context>
chip_gen: v5e
topology: v5e:2x2
jax: 0.10.0
libtpu: 0.0.40
codegen_flags: <defaults>
</compile_context>

<pallas_src>
import functools
import math

import jax
import jax.numpy as jnp
from jax.experimental import pallas as pl
from jax.experimental.pallas import tpu as pltpu

LANES = 128        # vreg lane width (last dim)
SUBLANES = 8       # vreg sublanes (second-to-last dim)
R_BLOCK_MAX = 512  # rows-of-128 per grid step


def mlp_kernel(params_ref, x_ref, o_ref, *, layer_dims, sub_rows):
    """Fused tiny-MLP forward on one (features, r_block, 128) batch tile.

    params_ref : (P,) f32 in SMEM — packed [W0 row-major, b0, W1, b1, ...]
    x_ref      : (in_features, r_block, 128) f32 in VMEM
    o_ref      : (out_features, r_block, 128) f32 in VMEM
    """
    n_layers = len(layer_dims)
    fan_in0 = layer_dims[0][0]
    r_block = x_ref.shape[1]
    n_sub = r_block // sub_rows

    def process_chunk(row0):
        # Dense (sub_rows, 128) slabs — full sublane + lane utilization.
        h = [x_ref[i, pl.ds(row0, sub_rows), :] for i in range(fan_in0)]
        idx = 0
        for li, (fan_in, fan_out) in enumerate(layer_dims):
            w_base = idx
            b_base = idx + fan_in * fan_out
            idx = b_base + fan_out
            new_h = []
            for j in range(fan_out):
                # acc = sum_i h[i] * W[i, j] + b[j]  (scalar-broadcast FMAs, VPU)
                acc = h[0] * params_ref[w_base + j]
                for i in range(1, fan_in):
                    acc = acc + h[i] * params_ref[w_base + i * fan_out + j]
                acc = acc + params_ref[b_base + j]
                if li < n_layers - 1:
                    acc = jnp.maximum(acc, 0.0)  # ReLU on hidden layers
                new_h.append(acc)
            h = new_h
        # Write feature rows directly (no concatenate / relayout).
        for j in range(len(h)):
            o_ref[j, pl.ds(row0, sub_rows), :] = h[j].astype(o_ref.dtype)

    if n_sub == 1:
        process_chunk(0)
    else:
        @pl.loop(0, n_sub)
        def _(s):
            process_chunk(pl.multiple_of(s * sub_rows, sub_rows))


def make_params(key, input_size=4, output_size=1, hidden=2):
    """Init mirroring PyTorch nn.Linear default U(-1/sqrt(fan_in), 1/sqrt(fan_in)).
    Weights stored as (in_features, out_features); biases as (out_features,).
    (PyTorch state_dicts store (out, in) — transpose when importing checkpoints.)"""
    dims = [(input_size, hidden), (hidden, hidden), (hidden, hidden),
            (hidden, hidden), (hidden, hidden), (hidden, output_size)]
    params = []
    for (fan_in, fan_out) in dims:
        key, kw, kb = jax.random.split(key, 3)
        bound = 1.0 / math.sqrt(fan_in)
        w = jax.random.uniform(kw, (fan_in, fan_out), jnp.float32, -bound, bound)
        b = jax.random.uniform(kb, (fan_out,), jnp.float32, -bound, bound)
        params.append((w, b))
    return params


def pack_params(params):
    """Concatenate all weights (row-major) and biases into one 1-D f32 buffer."""
    flat = []
    for (w, b) in params:
        flat.append(w.reshape(-1))
        flat.append(b.reshape(-1))
    return jnp.concatenate(flat).astype(jnp.float32)


def neural_network_forward(x, params, *, r_block_max=R_BLOCK_MAX):
    """x: (batch, in_features) f32, PyTorch layout. Returns (batch, out_features)."""
    batch, in_features = x.shape
    out_features = params[-1][0].shape[1]
    layer_dims = tuple((w.shape[0], w.shape[1]) for (w, _) in params)

    packed = pack_params(params)  # (37,) f32 -> SMEM via scalar prefetch

    # Batch tiling: rows of 128 lanes, r_block rows per grid step.
    rows_needed = (batch + LANES - 1) // LANES
    r_block = r_block_max if rows_needed >= r_block_max else rows_needed
    rows_total = ((rows_needed + r_block - 1) // r_block) * r_block
    padded_batch = rows_total * LANES
    sub_rows = math.gcd(r_block, SUBLANES)  # in-register chunk height

    # Lane-dense, feature-major layout: (in_features, rows, 128).
    xt = x.astype(jnp.float32).T
    if padded_batch != batch:
        xt = jnp.pad(xt, ((0, 0), (0, padded_batch - batch)))
    xt = xt.reshape(in_features, rows_total, LANES)

    kernel = functools.partial(mlp_kernel, layer_dims=layer_dims,
                               sub_rows=sub_rows)

    out_t = pl.pallas_call(
        kernel,
        out_shape=jax.ShapeDtypeStruct((out_features, rows_total, LANES),
                                       jnp.float32),
        grid_spec=pltpu.PrefetchScalarGridSpec(
            num_scalar_prefetch=1,                       # packed params -> SMEM
            grid=(rows_total // r_block,),
            in_specs=[pl.BlockSpec((in_features, r_block, LANES),
                                   lambda r, params_ref: (0, r, 0))],
            out_specs=pl.BlockSpec((out_features, r_block, LANES),
                                   lambda r, params_ref: (0, r, 0)),
        ),
        compiler_params=pltpu.CompilerParams(
            dimension_semantics=("parallel",)),  # v7x: shard batch over 2 TCs
    )(packed, xt)

    # (out_features, padded_batch) -> (batch, out_features); for out_features=1
    # the transpose is order-preserving (free reshape).
    out = out_t.reshape(out_features, padded_batch).T
    return out[:batch]


def reference_forward(x, params):
    h = x
    for i, (w, b) in enumerate(params):
        h = h @ w + b
        if i < len(params) - 1:
            h = jnp.maximum(h, 0.0)
    return h


if __name__ == "__main__":
    key = jax.random.PRNGKey(0)
    key, kx = jax.random.split(key)

    batch, input_size, output_size, hidden = 8, 4, 1, 2
    x = jax.random.normal(kx, (batch, input_size), jnp.float32)
    params = make_params(key, input_size=input_size,
                         output_size=output_size, hidden=hidden)

    out = neural_network_forward(x, params)
    out = jax.block_until_ready(out)

    ref = reference_forward(x, params)
    assert out.shape == (batch, output_size), out.shape
    assert jnp.allclose(out, ref, atol=1e-5, rtol=1e-5), (out, ref)

    print("KERNEL_OK")
</pallas_src>

<mosaic_0001>
module attributes {stable_mosaic.version = 11 : i64} {
  func.func @mlp_kernel(%arg0: i32, %arg1: memref<37xf32, #tpu.memory_space<smem>>, %arg2: memref<4x1x128xf32, #tpu.memory_space<vmem>>, %arg3: memref<1x1x128xf32, #tpu.memory_space<vmem>>) attributes {dimension_semantics = [#tpu.dimension_semantics<parallel>], iteration_bounds = array<i64: 1>, scalar_prefetch = 1 : i64, scratch_operands = 0 : i64, tpu.core_type = #tpu.core_type<tc>, window_params = [{transform_indices = @transform_0, window_bounds = array<i64: 4, 1, 128>}, {transform_indices = @transform_1, window_bounds = array<i64: 1, 1, 128>}]} {
    %c0 = arith.constant 0 : index
    %c0_0 = arith.constant 0 : index
    %c0_1 = arith.constant 0 : index
    %0 = vector.load %arg2[%c0, %c0_0, %c0_1] : memref<4x1x128xf32, #tpu.memory_space<vmem>>, vector<1x1x128xf32>
    %1 = vector.shape_cast %0 : vector<1x1x128xf32> to vector<1x128xf32>
    %c1 = arith.constant 1 : index
    %c0_2 = arith.constant 0 : index
    %c0_3 = arith.constant 0 : index
    %2 = vector.load %arg2[%c1, %c0_2, %c0_3] : memref<4x1x128xf32, #tpu.memory_space<vmem>>, vector<1x1x128xf32>
    %3 = vector.shape_cast %2 : vector<1x1x128xf32> to vector<1x128xf32>
    %c2 = arith.constant 2 : index
    %c0_4 = arith.constant 0 : index
    %c0_5 = arith.constant 0 : index
    %4 = vector.load %arg2[%c2, %c0_4, %c0_5] : memref<4x1x128xf32, #tpu.memory_space<vmem>>, vector<1x1x128xf32>
    %5 = vector.shape_cast %4 : vector<1x1x128xf32> to vector<1x128xf32>
    %c3 = arith.constant 3 : index
    %c0_6 = arith.constant 0 : index
    %c0_7 = arith.constant 0 : index
    %6 = vector.load %arg2[%c3, %c0_6, %c0_7] : memref<4x1x128xf32, #tpu.memory_space<vmem>>, vector<1x1x128xf32>
    %7 = vector.shape_cast %6 : vector<1x1x128xf32> to vector<1x128xf32>
    %c0_8 = arith.constant 0 : index
    %8 = memref.load %arg1[%c0_8] : memref<37xf32, #tpu.memory_space<smem>>
    %9 = vector.broadcast %8 : f32 to vector<1x128xf32>
    %10 = arith.mulf %1, %9 : vector<1x128xf32>
    %c2_9 = arith.constant 2 : index
    %11 = memref.load %arg1[%c2_9] : memref<37xf32, #tpu.memory_space<smem>>
    %12 = vector.broadcast %11 : f32 to vector<1x128xf32>
    %13 = arith.mulf %3, %12 : vector<1x128xf32>
    %14 = arith.addf %10, %13 : vector<1x128xf32>
    %c4 = arith.constant 4 : index
    %15 = memref.load %arg1[%c4] : memref<37xf32, #tpu.memory_space<smem>>
    %16 = vector.broadcast %15 : f32 to vector<1x128xf32>
    %17 = arith.mulf %5, %16 : vector<1x128xf32>
    %18 = arith.addf %14, %17 : vector<1x128xf32>
    %c6 = arith.constant 6 : index
    %19 = memref.load %arg1[%c6] : memref<37xf32, #tpu.memory_space<smem>>
    %20 = vector.broadcast %19 : f32 to vector<1x128xf32>
    %21 = arith.mulf %7, %20 : vector<1x128xf32>
    %22 = arith.addf %18, %21 : vector<1x128xf32>
    %c8 = arith.constant 8 : index
    %23 = memref.load %arg1[%c8] : memref<37xf32, #tpu.memory_space<smem>>
    %24 = vector.broadcast %23 : f32 to vector<1x128xf32>
    %25 = arith.addf %22, %24 : vector<1x128xf32>
    %cst = arith.constant 0.000000e+00 : f32
    %26 = vector.broadcast %cst : f32 to vector<1x128xf32>
    %27 = arith.maximumf %25, %26 : vector<1x128xf32>
    %c1_10 = arith.constant 1 : index
    %28 = memref.load %arg1[%c1_10] : memref<37xf32, #tpu.memory_space<smem>>
    %29 = vector.broadcast %28 : f32 to vector<1x128xf32>
    %30 = arith.mulf %1, %29 : vector<1x128xf32>
    %c3_11 = arith.constant 3 : index
    %31 = memref.load %arg1[%c3_11] : memref<37xf32, #tpu.memory_space<smem>>
    %32 = vector.broadcast %31 : f32 to vector<1x128xf32>
    %33 = arith.mulf %3, %32 : vector<1x128xf32>
    %34 = arith.addf %30, %33 : vector<1x128xf32>
    %c5 = arith.constant 5 : index
    %35 = memref.load %arg1[%c5] : memref<37xf32, #tpu.memory_space<smem>>
    %36 = vector.broadcast %35 : f32 to vector<1x128xf32>
    %37 = arith.mulf %5, %36 : vector<1x128xf32>
    %38 = arith.addf %34, %37 : vector<1x128xf32>
    %c7 = arith.constant 7 : index
    %39 = memref.load %arg1[%c7] : memref<37xf32, #tpu.memory_space<smem>>
    %40 = vector.broadcast %39 : f32 to vector<1x128xf32>
    %41 = arith.mulf %7, %40 : vector<1x128xf32>
    %42 = arith.addf %38, %41 : vector<1x128xf32>
    %c9 = arith.constant 9 : index
    %43 = memref.load %arg1[%c9] : memref<37xf32, #tpu.memory_space<smem>>
    %44 = vector.broadcast %43 : f32 to vector<1x128xf32>
    %45 = arith.addf %42, %44 : vector<1x128xf32>
    %cst_12 = arith.constant 0.000000e+00 : f32
    %46 = vector.broadcast %cst_12 : f32 to vector<1x128xf32>
    %47 = arith.maximumf %45, %46 : vector<1x128xf32>
    %c10 = arith.constant 10 : index
    %48 = memref.load %arg1[%c10] : memref<37xf32, #tpu.memory_space<smem>>
    %49 = vector.broadcast %48 : f32 to vector<1x128xf32>
    %50 = arith.mulf %27, %49 : vector<1x128xf32>
    %c12 = arith.constant 12 : index
    %51 = memref.load %arg1[%c12] : memref<37xf32, #tpu.memory_space<smem>>
    %52 = vector.broadcast %51 : f32 to vector<1x128xf32>
    %53 = arith.mulf %47, %52 : vector<1x128xf32>
    %54 = arith.addf %50, %53 : vector<1x128xf32>
    %c14 = arith.constant 14 : index
    %55 = memref.load %arg1[%c14] : memref<37xf32, #tpu.memory_space<smem>>
    %56 = vector.broadcast %55 : f32 to vector<1x128xf32>
    %57 = arith.addf %54, %56 : vector<1x128xf32>
    %cst_13 = arith.constant 0.000000e+00 : f32
    %58 = vector.broadcast %cst_13 : f32 to vector<1x128xf32>
    %59 = arith.maximumf %57, %58 : vector<1x128xf32>
    %c11 = arith.constant 11 : index
    %60 = memref.load %arg1[%c11] : memref<37xf32, #tpu.memory_space<smem>>
    %61 = vector.broadcast %60 : f32 to vector<1x128xf32>
    %62 = arith.mulf %27, %61 : vector<1x128xf32>
    %c13 = arith.constant 13 : index
    %63 = memref.load %arg1[%c13] : memref<37xf32, #tpu.memory_space<smem>>
    %64 = vector.broadcast %63 : f32 to vector<1x128xf32>
    %65 = arith.mulf %47, %64 : vector<1x128xf32>
    %66 = arith.addf %62, %65 : vector<1x128xf32>
    %c15 = arith.constant 15 : index
    %67 = memref.load %arg1[%c15] : memref<37xf32, #tpu.memory_space<smem>>
    %68 = vector.broadcast %67 : f32 to vector<1x128xf32>
    %69 = arith.addf %66, %68 : vector<1x128xf32>
    %cst_14 = arith.constant 0.000000e+00 : f32
    %70 = vector.broadcast %cst_14 : f32 to vector<1x128xf32>
    %71 = arith.maximumf %69, %70 : vector<1x128xf32>
    %c16 = arith.constant 16 : index
    %72 = memref.load %arg1[%c16] : memref<37xf32, #tpu.memory_space<smem>>
    %73 = vector.broadcast %72 : f32 to vector<1x128xf32>
    %74 = arith.mulf %59, %73 : vector<1x128xf32>
    %c18 = arith.constant 18 : index
    %75 = memref.load %arg1[%c18] : memref<37xf32, #tpu.memory_space<smem>>
    %76 = vector.broadcast %75 : f32 to vector<1x128xf32>
    %77 = arith.mulf %71, %76 : vector<1x128xf32>
    %78 = arith.addf %74, %77 : vector<1x128xf32>
    %c20 = arith.constant 20 : index
    %79 = memref.load %arg1[%c20] : memref<37xf32, #tpu.memory_space<smem>>
    %80 = vector.broadcast %79 : f32 to vector<1x128xf32>
    %81 = arith.addf %78, %80 : vector<1x128xf32>
    %cst_15 = arith.constant 0.000000e+00 : f32
    %82 = vector.broadcast %cst_15 : f32 to vector<1x128xf32>
    %83 = arith.maximumf %81, %82 : vector<1x128xf32>
    %c17 = arith.constant 17 : index
    %84 = memref.load %arg1[%c17] : memref<37xf32, #tpu.memory_space<smem>>
    %85 = vector.broadcast %84 : f32 to vector<1x128xf32>
    %86 = arith.mulf %59, %85 : vector<1x128xf32>
    %c19 = arith.constant 19 : index
    %87 = memref.load %arg1[%c19] : memref<37xf32, #tpu.memory_space<smem>>
    %88 = vector.broadcast %87 : f32 to vector<1x128xf32>
    %89 = arith.mulf %71, %88 : vector<1x128xf32>
    %90 = arith.addf %86, %89 : vector<1x128xf32>
    %c21 = arith.constant 21 : index
    %91 = memref.load %arg1[%c21] : memref<37xf32, #tpu.memory_space<smem>>
    %92 = vector.broadcast %91 : f32 to vector<1x128xf32>
    %93 = arith.addf %90, %92 : vector<1x128xf32>
    %cst_16 = arith.constant 0.000000e+00 : f32
    %94 = vector.broadcast %cst_16 : f32 to vector<1x128xf32>
    %95 = arith.maximumf %93, %94 : vector<1x128xf32>
    %c22 = arith.constant 22 : index
    %96 = memref.load %arg1[%c22] : memref<37xf32, #tpu.memory_space<smem>>
    %97 = vector.broadcast %96 : f32 to vector<1x128xf32>
    %98 = arith.mulf %83, %97 : vector<1x128xf32>
    %c24 = arith.constant 24 : index
    %99 = memref.load %arg1[%c24] : memref<37xf32, #tpu.memory_space<smem>>
    %100 = vector.broadcast %99 : f32 to vector<1x128xf32>
    %101 = arith.mulf %95, %100 : vector<1x128xf32>
    %102 = arith.addf %98, %101 : vector<1x128xf32>
    %c26 = arith.constant 26 : index
    %103 = memref.load %arg1[%c26] : memref<37xf32, #tpu.memory_space<smem>>
    %104 = vector.broadcast %103 : f32 to vector<1x128xf32>
    %105 = arith.addf %102, %104 : vector<1x128xf32>
    %cst_17 = arith.constant 0.000000e+00 : f32
    %106 = vector.broadcast %cst_17 : f32 to vector<1x128xf32>
    %107 = arith.maximumf %105, %106 : vector<1x128xf32>
    %c23 = arith.constant 23 : index
    %108 = memref.load %arg1[%c23] : memref<37xf32, #tpu.memory_space<smem>>
    %109 = vector.broadcast %108 : f32 to vector<1x128xf32>
    %110 = arith.mulf %83, %109 : vector<1x128xf32>
    %c25 = arith.constant 25 : index
    %111 = memref.load %arg1[%c25] : memref<37xf32, #tpu.memory_space<smem>>
    %112 = vector.broadcast %111 : f32 to vector<1x128xf32>
    %113 = arith.mulf %95, %112 : vector<1x128xf32>
    %114 = arith.addf %110, %113 : vector<1x128xf32>
    %c27 = arith.constant 27 : index
    %115 = memref.load %arg1[%c27] : memref<37xf32, #tpu.memory_space<smem>>
    %116 = vector.broadcast %115 : f32 to vector<1x128xf32>
    %117 = arith.addf %114, %116 : vector<1x128xf32>
    %cst_18 = arith.constant 0.000000e+00 : f32
    %118 = vector.broadcast %cst_18 : f32 to vector<1x128xf32>
    %119 = arith.maximumf %117, %118 : vector<1x128xf32>
    %c28 = arith.constant 28 : index
    %120 = memref.load %arg1[%c28] : memref<37xf32, #tpu.memory_space<smem>>
    %121 = vector.broadcast %120 : f32 to vector<1x128xf32>
    %122 = arith.mulf %107, %121 : vector<1x128xf32>
    %c30 = arith.constant 30 : index
    %123 = memref.load %arg1[%c30] : memref<37xf32, #tpu.memory_space<smem>>
    %124 = vector.broadcast %123 : f32 to vector<1x128xf32>
    %125 = arith.mulf %119, %124 : vector<1x128xf32>
    %126 = arith.addf %122, %125 : vector<1x128xf32>
    %c32 = arith.constant 32 : index
    %127 = memref.load %arg1[%c32] : memref<37xf32, #tpu.memory_space<smem>>
    %128 = vector.broadcast %127 : f32 to vector<1x128xf32>
    %129 = arith.addf %126, %128 : vector<1x128xf32>
    %cst_19 = arith.constant 0.000000e+00 : f32
    %130 = vector.broadcast %cst_19 : f32 to vector<1x128xf32>
    %131 = arith.maximumf %129, %130 : vector<1x128xf32>
    %c29 = arith.constant 29 : index
    %132 = memref.load %arg1[%c29] : memref<37xf32, #tpu.memory_space<smem>>
    %133 = vector.broadcast %132 : f32 to vector<1x128xf32>
    %134 = arith.mulf %107, %133 : vector<1x128xf32>
    %c31 = arith.constant 31 : index
    %135 = memref.load %arg1[%c31] : memref<37xf32, #tpu.memory_space<smem>>
    %136 = vector.broadcast %135 : f32 to vector<1x128xf32>
    %137 = arith.mulf %119, %136 : vector<1x128xf32>
    %138 = arith.addf %134, %137 : vector<1x128xf32>
    %c33 = arith.constant 33 : index
    %139 = memref.load %arg1[%c33] : memref<37xf32, #tpu.memory_space<smem>>
    %140 = vector.broadcast %139 : f32 to vector<1x128xf32>
    %141 = arith.addf %138, %140 : vector<1x128xf32>
    %cst_20 = arith.constant 0.000000e+00 : f32
    %142 = vector.broadcast %cst_20 : f32 to vector<1x128xf32>
    %143 = arith.maximumf %141, %142 : vector<1x128xf32>
    %c34 = arith.constant 34 : index
    %144 = memref.load %arg1[%c34] : memref<37xf32, #tpu.memory_space<smem>>
    %145 = vector.broadcast %144 : f32 to vector<1x128xf32>
    %146 = arith.mulf %131, %145 : vector<1x128xf32>
    %c35 = arith.constant 35 : index
    %147 = memref.load %arg1[%c35] : memref<37xf32, #tpu.memory_space<smem>>
    %148 = vector.broadcast %147 : f32 to vector<1x128xf32>
    %149 = arith.mulf %143, %148 : vector<1x128xf32>
    %150 = arith.addf %146, %149 : vector<1x128xf32>
    %c36 = arith.constant 36 : index
    %151 = memref.load %arg1[%c36] : memref<37xf32, #tpu.memory_space<smem>>
    %152 = vector.broadcast %151 : f32 to vector<1x128xf32>
    %153 = arith.addf %150, %152 : vector<1x128xf32>
    %c0_21 = arith.constant 0 : index
    %c0_22 = arith.constant 0 : index
    %c0_23 = arith.constant 0 : index
    %154 = vector.load %arg3[%c0_21, %c0_22, %c0_23] : memref<1x1x128xf32, #tpu.memory_space<vmem>>, vector<1x1x128xf32>
    %155 = vector.shape_cast %154 : vector<1x1x128xf32> to vector<1x128xf32>
    %156 = vector.shape_cast %153 : vector<1x128xf32> to vector<1x1x128xf32>
    tpu.vector_store %arg3[%c0_21, %c0_22, %c0_23], %156 {strides = array<i32>} : memref<1x1x128xf32, #tpu.memory_space<vmem>>, vector<1x1x128xf32>,
    return
  }
  func.func @transform_0(%arg0: i32, %arg1: memref<37xf32, #tpu.memory_space<smem>>) -> (i32, i32, i32) {
    %c0_i32 = arith.constant 0 : i32
    %c0_i32_0 = arith.constant 0 : i32
    %c0_i32_1 = arith.constant 0 : i32
    return %c0_i32, %arg0, %c0_i32_0 : i32, i32, i32
  }
  func.func @transform_1(%arg0: i32, %arg1: memref<37xf32, #tpu.memory_space<smem>>) -> (i32, i32, i32) {
    %c0_i32 = arith.constant 0 : i32
    %c0_i32_0 = arith.constant 0 : i32
    %c0_i32_1 = arith.constant 0 : i32
    return %c0_i32, %arg0, %c0_i32_0 : i32, i32, i32
  }
}

</mosaic_0001>

<llo_original>
// kernel: tpu_custom_call.1
$region0: #{tpu_custom_call.1}
  #allocation0 [shape = 'u32[]', space=smem, size = 0x4, offset = 0x4, fixed_abs, tag = 'smem constant byte address 0x4 - core index']
  #allocation1 [shape = 'u32[72,128]{1,0:T(1,128)}', space=vmem, size = 0x9000, scoped, tag = 'internal scratch']
  #allocation2 [shape = 's32[1]{0}', space=sflag, size = 0x4, scoped, tag = 'scoped memory for tpu_custom_call.1']
  #allocation3 [shape = 'u8[512]{0}', space=smem, size = 0x200, scoped, tag = 'prefetched SMEM operand 0']
  %s0 = inlined_call_operand.hbm [shape: f32[37], index: 0, kind: input, shape index: {}]
  %s1 = inlined_call_operand.hbm [shape: f32[4,1,128], index: 1, kind: input, shape index: {}]
  %s2 = inlined_call_operand.hbm [shape: f32[1,1,128], index: 2, kind: output, shape index: {}]
  %s3 = sld [smem:[#allocation0]]
  $region18: #{tpu_custom_call.1} parent=0
    _
  %s5 = ssub.s32 1, %s3
  %s6 = scalar_select 0, %s5, %s3
  %s8 = sshll.u32 %s0, 4
  %s9 = int_to_ptr.hbm [resolvable:$true] %s8
  %11 = dma.hbm_to_smem %s9, 16, [#allocation3], [#allocation2]
  %13 = dma.done [#allocation2], 16
  %14 = sfence
  $region1: #{tpu_custom_call.1} parent=0
    #allocation4 [shape = 'u8[2048]{0}', space=vmem, size = 0x800, scoped, tag = 'input window, operand 1, single buffered']
    #allocation5 [shape = 's32[1]{0}', space=sflag, size = 0x4, scoped, tag = 'scoped memory for tpu_custom_call.1']
    #allocation6 [shape = 's32[1]{0}', space=sflag, size = 0x4, scoped, tag = 'scoped memory for tpu_custom_call.1']
    #allocation7 [shape = 'u8[512]{0}', space=vmem, size = 0x400, scoped, tag = 'output window, operand 0, single buffered']
    %15 = vsyncpa [#allocation5], 0
    %16 = vsyncpa [#allocation6], 0
    // Predicated region
    $region2: #{tpu_custom_call.1} parent=1 // pred_check
      _
    $region3: #{tpu_custom_call.1} parent=1 // pred_check_branch
      %18 = sbr.rel (0) target = $region5
    $region4: #{tpu_custom_call.1} parent=1 // pred_region
      %20 = vsyncadd [#allocation5], 0
      %s21 = sshll.u32 %s1, 4
      %s22 = int_to_ptr.hbm [resolvable:$true] %s21
      %s23 = sshll.u32 [#allocation4], 4
      %s24 = int_to_ptr.vmem [resolvable:$true] %s23
      %29 = dma.hbm_to_vmem [thread:$0]  %s22, 64, %s24, [#allocation5], 16, 16, 1
    $region5: #{tpu_custom_call.1} parent=1 // pred_fallthru
      _
    // Predicated region
    $region6: #{tpu_custom_call.1} parent=1 // pred_check
      _
    $region7: #{tpu_custom_call.1} parent=1 // pred_check_branch
      %31 = sbr.rel (0) target = $region9
    $region8: #{tpu_custom_call.1} parent=1 // pred_region
      %33 = dma.done [#allocation5], 64
    $region9: #{tpu_custom_call.1} parent=1 // pred_fallthru
      _
    %v34 = vld [vmem:[#allocation4] sm:$0x1]
    %s35 = scalar_lea.vmem [#allocation4], 1
    %v36 = vld [vmem:[%s35] sm:$0x1]
    %s37 = scalar_lea.vmem [#allocation4], 2
    %v38 = vld [vmem:[%s37] sm:$0x1]
    %s39 = scalar_lea.vmem [#allocation4], 3
    %v40 = vld [vmem:[%s39] sm:$0x1]
    %s41 = sld [smem:[#allocation3]]
    %v42 = vstv %s41
    %v43 = vmul.f32 %v34, %v42
    %s44 = sld [smem:[#allocation3 + $0x2]]
    %v45 = vstv %s44
    %v46 = vmul.f32 %v36, %v45
    %v47 = vadd.f32 %v43, %v46
    %s48 = sld [smem:[#allocation3 + $0x4]]
    %v49 = vstv %s48
    %v50 = vmul.f32 %v38, %v49
    %v51 = vadd.f32 %v47, %v50
    %s52 = sld [smem:[#allocation3 + $0x6]]
    %v53 = vstv %s52
    %v54 = vmul.f32 %v40, %v53
    %v55 = vadd.f32 %v51, %v54
    %s56 = sld [smem:[#allocation3 + $0x8]]
    %v57 = vstv %s56
    %v58 = vadd.f32 %v55, %v57
    %v59 = vmax.f32 %v58, 0.0
    %s60 = sld [smem:[#allocation3 + $0x1]]
    %v61 = vstv %s60
    %v62 = vmul.f32 %v34, %v61
    %s63 = sld [smem:[#allocation3 + $0x3]]
    %v64 = vstv %s63
    %v65 = vmul.f32 %v36, %v64
    %v66 = vadd.f32 %v62, %v65
    %s67 = sld [smem:[#allocation3 + $0x5]]
    %v68 = vstv %s67
    %v69 = vmul.f32 %v38, %v68
    %v70 = vadd.f32 %v66, %v69
    %s71 = sld [smem:[#allocation3 + $0x7]]
    %v72 = vstv %s71
    %v73 = vmul.f32 %v40, %v72
    %v74 = vadd.f32 %v70, %v73
    %s75 = sld [smem:[#allocation3 + $0x9]]
    %v76 = vstv %s75
    %v77 = vadd.f32 %v74, %v76
    %v78 = vmax.f32 %v77, 0.0
    %s79 = sld [smem:[#allocation3 + $0xa]]
    %v80 = vstv %s79
    %v81 = vmul.f32 %v59, %v80
    %s82 = sld [smem:[#allocation3 + $0xc]]
    %v83 = vstv %s82
    %v84 = vmul.f32 %v78, %v83
    %v85 = vadd.f32 %v81, %v84
    %s86 = sld [smem:[#allocation3 + $0xe]]
    %v87 = vstv %s86
    %v88 = vadd.f32 %v85, %v87
    %v89 = vmax.f32 %v88, 0.0
    %s90 = sld [smem:[#allocation3 + $0xb]]
    %v91 = vstv %s90
    %v92 = vmul.f32 %v59, %v91
    %s93 = sld [smem:[#allocation3 + $0xd]]
    %v94 = vstv %s93
    %v95 = vmul.f32 %v78, %v94
    %v96 = vadd.f32 %v92, %v95
    %s97 = sld [smem:[#allocation3 + $0xf]]
    %v98 = vstv %s97
    %v99 = vadd.f32 %v96, %v98
    %v100 = vmax.f32 %v99, 0.0
    %s101 = sld [smem:[#allocation3 + $0x10]]
    %v102 = vstv %s101
    %v103 = vmul.f32 %v89, %v102
    %s104 = sld [smem:[#allocation3 + $0x12]]
    %v105 = vstv %s104
    %v106 = vmul.f32 %v100, %v105
    %v107 = vadd.f32 %v103, %v106
    %s108 = sld [smem:[#allocation3 + $0x14]]
    %v109 = vstv %s108
    %v110 = vadd.f32 %v107, %v109
    %v111 = vmax.f32 %v110, 0.0
    %s112 = sld [smem:[#allocation3 + $0x11]]
    %v113 = vstv %s112
    %v114 = vmul.f32 %v89, %v113
    %s115 = sld [smem:[#allocation3 + $0x13]]
    %v116 = vstv %s115
    %v117 = vmul.f32 %v100, %v116
    %v118 = vadd.f32 %v114, %v117
    %s119 = sld [smem:[#allocation3 + $0x15]]
    %v120 = vstv %s119
    %v121 = vadd.f32 %v118, %v120
    %v122 = vmax.f32 %v121, 0.0
    %s123 = sld [smem:[#allocation3 + $0x16]]
    %v124 = vstv %s123
    %v125 = vmul.f32 %v111, %v124
    %s126 = sld [smem:[#allocation3 + $0x18]]
    %v127 = vstv %s126
    %v128 = vmul.f32 %v122, %v127
    %v129 = vadd.f32 %v125, %v128
    %s130 = sld [smem:[#allocation3 + $0x1a]]
    %v131 = vstv %s130
    %v132 = vadd.f32 %v129, %v131
    %v133 = vmax.f32 %v132, 0.0
    %s134 = sld [smem:[#allocation3 + $0x17]]
    %v135 = vstv %s134
    %v136 = vmul.f32 %v111, %v135
    %s137 = sld [smem:[#allocation3 + $0x19]]
    %v138 = vstv %s137
    %v139 = vmul.f32 %v122, %v138
    %v140 = vadd.f32 %v136, %v139
    %s141 = sld [smem:[#allocation3 + $0x1b]]
    %v142 = vstv %s141
    %v143 = vadd.f32 %v140, %v142
    %v144 = vmax.f32 %v143, 0.0
    %s145 = sld [smem:[#allocation3 + $0x1c]]
    %v146 = vstv %s145
    %v147 = vmul.f32 %v133, %v146
    %s148 = sld [smem:[#allocation3 + $0x1e]]
    %v149 = vstv %s148
    %v150 = vmul.f32 %v144, %v149
    %v151 = vadd.f32 %v147, %v150
    %s152 = sld [smem:[#allocation3 + $0x20]]
    %v153 = vstv %s152
    %v154 = vadd.f32 %v151, %v153
    %v155 = vmax.f32 %v154, 0.0
    %s156 = sld [smem:[#allocation3 + $0x1d]]
    %v157 = vstv %s156
    %v158 = vmul.f32 %v133, %v157
    %s159 = sld [smem:[#allocation3 + $0x1f]]
    %v160 = vstv %s159
    %v161 = vmul.f32 %v144, %v160
    %v162 = vadd.f32 %v158, %v161
    %s163 = sld [smem:[#allocation3 + $0x21]]
    %v164 = vstv %s163
    %v165 = vadd.f32 %v162, %v164
    %v166 = vmax.f32 %v165, 0.0
    %s167 = sld [smem:[#allocation3 + $0x22]]
    %v168 = vstv %s167
    %v169 = vmul.f32 %v155, %v168
    %s170 = sld [smem:[#allocation3 + $0x23]]
    %v171 = vstv %s170
    %v172 = vmul.f32 %v166, %v171
    %v173 = vadd.f32 %v169, %v172
    %s174 = sld [smem:[#allocation3 + $0x24]]
    %v175 = vstv %s174
    %v176 = vadd.f32 %v173, %v175
    %177 = vst [vmem:[#allocation7] sm:$0x1] %v176
    // Predicated region
    $region10: #{tpu_custom_call.1} parent=1 // pred_check
      _
    $region11: #{tpu_custom_call.1} parent=1 // pred_check_branch
      %179 = sbr.rel (0) target = $region13
    $region12: #{tpu_custom_call.1} parent=1 // pred_region
      %181 = vsyncadd [#allocation6], 0
      %s183 = sshll.u32 [#allocation7], 4
      %s184 = int_to_ptr.vmem [resolvable:$true] %s183
      %s185 = sshll.u32 %s2, 4
      %s186 = int_to_ptr.hbm [resolvable:$true] %s185
      %188 = dma.vmem_to_hbm [thread:$0]  %s184, 16, %s186, [#allocation6]
    $region13: #{tpu_custom_call.1} parent=1 // pred_fallthru
      _
    // Predicated region
    $region14: #{tpu_custom_call.1} parent=1 // pred_check
      _
    $region15: #{tpu_custom_call.1} parent=1 // pred_check_branch
      %190 = sbr.rel (0) target = $region17
    $region16: #{tpu_custom_call.1} parent=1 // pred_region
      %192 = dma.done [#allocation6], 16
    $region17: #{tpu_custom_call.1} parent=1 // pred_fallthru
      _
    %193 = vsyncpa [#allocation5], 1
    %194 = vsyncpa [#allocation6], 1

</llo_original>
